<compile_context>
chip_gen: v5e
topology: v5e:2x2
jax: 0.10.0
libtpu: 0.0.40
codegen_flags: <defaults>
</compile_context>

<pallas_src>
import functools

import jax
import jax.numpy as jnp
from jax import lax
from jax.experimental import pallas as pl
from jax.experimental.pallas import tpu as pltpu


def _corr_kernel(x_ref, y_ref, o_ref,
                 sx_ref, sy_ref, sxy_ref, sxx_ref, syy_ref,
                 *, n_rows, n_batch):
    """One L-tile of the batch-mean Pearson correlation.

    x_ref, y_ref : (TN, TL) tile of one batch element (batch dim squeezed)
    o_ref        : (1, TL) output block; resident across the (b, n) axes and
                   used directly as the batch accumulator.
    s*_ref       : (1, TL) f32 moment accumulators (reset per batch element).
    """
    b = pl.program_id(1)
    n = pl.program_id(2)
    nb = pl.num_programs(1)
    nn = pl.num_programs(2)

    # New L tile: zero the output accumulator.
    @pl.when(jnp.logical_and(b == 0, n == 0))
    def _():
        o_ref[...] = jnp.zeros_like(o_ref)

    # New batch element: zero the moment accumulators.
    @pl.when(n == 0)
    def _():
        zeros = jnp.zeros_like(sx_ref)
        sx_ref[...] = zeros
        sy_ref[...] = zeros
        sxy_ref[...] = zeros
        sxx_ref[...] = zeros
        syy_ref[...] = zeros

    x = x_ref[...].astype(jnp.float32)
    y = y_ref[...].astype(jnp.float32)

    sx_ref[...] += jnp.sum(x, axis=0, keepdims=True)
    sy_ref[...] += jnp.sum(y, axis=0, keepdims=True)
    sxy_ref[...] += jnp.sum(x * y, axis=0, keepdims=True)
    sxx_ref[...] += jnp.sum(x * x, axis=0, keepdims=True)
    syy_ref[...] += jnp.sum(y * y, axis=0, keepdims=True)

    # Finished the N reduction for this batch element: combine moments.
    @pl.when(n == nn - 1)
    def _():
        inv_n = jnp.float32(1.0 / n_rows)
        sx = sx_ref[...]
        sy = sy_ref[...]
        cov = sxy_ref[...] - sx * sy * inv_n
        # Clamp tiny negative values from one-pass cancellation.
        var_x = jnp.maximum(sxx_ref[...] - sx * sx * inv_n, 0.0)
        var_y = jnp.maximum(syy_ref[...] - sy * sy * inv_n, 0.0)
        prod = var_x * var_y
        # torch: denom = sqrt(prod); denom[denom == 0] += 1e-7; corr = cov/denom
        inv_denom = jnp.where(prod == 0.0,
                              jnp.float32(1.0 / 1e-7),
                              lax.rsqrt(prod))
        o_ref[...] += cov * inv_denom

        # Last batch element: convert the running sum into the batch mean.
        @pl.when(b == nb - 1)
        def _():
            o_ref[...] = o_ref[...] * jnp.float32(1.0 / n_batch)


def _round_up(x, m):
    return ((x + m - 1) // m) * m


def _pick_lane_tile(l_pad):
    """Largest multiple of 128 that divides l_pad and is <= 512."""
    k = l_pad // 128
    for d in (4, 3, 2, 1):
        if k % d == 0:
            return 128 * d
    return 128


@functools.partial(jax.jit, static_argnames=("reduction",))
def correlation_loss(pred, target, reduction="none"):
    """JAX/Pallas equivalent of CorrelationLoss.forward."""
    B = pred.shape[0]
    L = pred.shape[-1]
    x = pred.reshape(B, -1, L)
    y = target.reshape(B, -1, L)
    N = x.shape[1]

    # Lane-dense L tiling (multiple of 128, <= 512 wide).
    L_pad = _round_up(max(L, 1), 128)
    TL = _pick_lane_tile(L_pad)
    # N (reduction) tiling: multiple of 8, capped so 2 inputs x 2 buffers of
    # (TN, TL) f32 stays well under every chip's scoped-VMEM default.
    TN = min(_round_up(N, 8), 1024)
    N_pad = _round_up(N, TN)

    if L_pad != L or N_pad != N:
        pad = ((0, 0), (0, N_pad - N), (0, L_pad - L))
        x = jnp.pad(x, pad)
        y = jnp.pad(y, pad)

    grid = (L_pad // TL, B, N_pad // TN)

    kernel = functools.partial(_corr_kernel, n_rows=N, n_batch=B)

    corr = pl.pallas_call(
        kernel,
        out_shape=jax.ShapeDtypeStruct((1, L_pad), jnp.float32),
        grid_spec=pltpu.PrefetchScalarGridSpec(
            num_scalar_prefetch=0,
            grid=grid,
            in_specs=[
                pl.BlockSpec((None, TN, TL), lambda l, b, n: (b, n, l)),
                pl.BlockSpec((None, TN, TL), lambda l, b, n: (b, n, l)),
            ],
            out_specs=pl.BlockSpec((1, TL), lambda l, b, n: (0, l)),
            scratch_shapes=[pltpu.VMEM((1, TL), jnp.float32)] * 5,
        ),
        compiler_params=pltpu.CompilerParams(
            # L tiles are independent outputs -> megacore-parallel on v7x;
            # batch and N axes are reductions into the resident output block.
            dimension_semantics=("parallel", "arbitrary", "arbitrary"),
        ),
    )(x, y)

    corr = corr[0, :L]

    if reduction == "mean":
        return jnp.mean(corr)
    elif reduction == "sum":
        return jnp.sum(corr)
    else:
        return corr


def _reference(pred, target, reduction="none"):
    """Pure-JAX reference mirroring the PyTorch module exactly (two-pass)."""
    B = pred.shape[0]
    L = pred.shape[-1]
    x = pred.reshape(B, -1, L)
    y = target.reshape(B, -1, L)
    x_bar = x - jnp.mean(x, axis=1, keepdims=True)
    y_bar = y - jnp.mean(y, axis=1, keepdims=True)
    cov = jnp.sum(y_bar * x_bar, axis=1)
    var_x = jnp.sum(x_bar * x_bar, axis=1)
    var_y = jnp.sum(y_bar * y_bar, axis=1)
    denom = jnp.sqrt(var_x * var_y)
    denom = jnp.where(denom == 0.0, denom + 1e-7, denom)
    corr = jnp.mean(cov / denom, axis=0)
    if reduction == "mean":
        return jnp.mean(corr)
    elif reduction == "sum":
        return jnp.sum(corr)
    return corr


if __name__ == "__main__":
    key = jax.random.PRNGKey(0)
    k1, k2, k3, k4 = jax.random.split(key, 4)

    # (B, C, H, W) -> flattened inside to (B, C*H, W)
    pred = jax.random.normal(k1, (2, 4, 16, 16), dtype=jnp.float32)
    target = jax.random.normal(k2, (2, 4, 16, 16), dtype=jnp.float32)

    out = correlation_loss(pred, target, reduction="none")
    jax.block_until_ready(out)

    ref = _reference(pred, target, reduction="none")
    assert out.shape == ref.shape == (16,)
    assert jnp.allclose(out, ref, atol=1e-5, rtol=1e-4), (out, ref)

    for red in ("mean", "sum"):
        o = correlation_loss(pred, target, reduction=red)
        r = _reference(pred, target, reduction=red)
        assert jnp.allclose(o, r, atol=1e-5, rtol=1e-4), (red, o, r)

    # Second shape exercising N/L zero-padding paths (N=30, L=20).
    pred2 = jax.random.normal(k3, (2, 3, 10, 20), dtype=jnp.float32)
    target2 = jax.random.normal(k4, (2, 3, 10, 20), dtype=jnp.float32)
    out2 = correlation_loss(pred2, target2, reduction="none")
    jax.block_until_ready(out2)
    ref2 = _reference(pred2, target2, reduction="none")
    assert out2.shape == ref2.shape == (20,)
    assert jnp.allclose(out2, ref2, atol=1e-5, rtol=1e-4), (out2, ref2)

    print("KERNEL_OK")
</pallas_src>

<mosaic_0001>
module attributes {stable_mosaic.version = 11 : i64} {
  func.func @_corr_kernel(%arg0: i32, %arg1: i32, %arg2: i32, %arg3: memref<1x64x128xf32, #tpu.memory_space<vmem>>, %arg4: memref<1x64x128xf32, #tpu.memory_space<vmem>>, %arg5: memref<1x128xf32, #tpu.memory_space<vmem>>, %arg6: memref<1x128xf32, #tpu.memory_space<vmem>>, %arg7: memref<1x128xf32, #tpu.memory_space<vmem>>, %arg8: memref<1x128xf32, #tpu.memory_space<vmem>>, %arg9: memref<1x128xf32, #tpu.memory_space<vmem>>, %arg10: memref<1x128xf32, #tpu.memory_space<vmem>>) attributes {dimension_semantics = [#tpu.dimension_semantics<parallel>, #tpu.dimension_semantics<arbitrary>, #tpu.dimension_semantics<arbitrary>], iteration_bounds = array<i64: 1, 2, 1>, scalar_prefetch = 0 : i64, scratch_operands = 5 : i64, tpu.core_type = #tpu.core_type<tc>, window_params = [{transform_indices = @transform_0, window_bounds = array<i64: 1, 64, 128>}, {transform_indices = @transform_1, window_bounds = array<i64: 1, 64, 128>}, {transform_indices = @transform_2, window_bounds = array<i64: 1, 128>}]} {
    %c0_i32 = arith.constant 0 : i32
    %0 = arith.cmpi eq, %arg1, %c0_i32 : i32
    %c0_i32_0 = arith.constant 0 : i32
    %1 = arith.cmpi eq, %arg2, %c0_i32_0 : i32
    %2 = arith.andi %0, %1 : i1
    %3 = arith.extui %2 : i1 to i32
    %c0_i32_1 = arith.constant 0 : i32
    %4 = arith.cmpi ne, %3, %c0_i32_1 : i32
    scf.if %4 {
      %cst_35 = arith.constant 0.000000e+00 : f32
      %43 = vector.broadcast %cst_35 : f32 to vector<1x128xf32>
      %c0_36 = arith.constant 0 : index
      %c0_37 = arith.constant 0 : index
      %44 = vector.load %arg5[%c0_36, %c0_37] : memref<1x128xf32, #tpu.memory_space<vmem>>, vector<1x128xf32>
      tpu.vector_store %arg5[%c0_36, %c0_37], %43 {strides = array<i32>} : memref<1x128xf32, #tpu.memory_space<vmem>>, vector<1x128xf32>,
    } else {
    }
    %c0_i32_2 = arith.constant 0 : i32
    %5 = arith.cmpi eq, %arg2, %c0_i32_2 : i32
    %6 = arith.extui %5 : i1 to i32
    %c0_i32_3 = arith.constant 0 : i32
    %7 = arith.cmpi ne, %6, %c0_i32_3 : i32
    scf.if %7 {
      %cst_35 = arith.constant 0.000000e+00 : f32
      %43 = vector.broadcast %cst_35 : f32 to vector<1x128xf32>
      %c0_36 = arith.constant 0 : index
      %c0_37 = arith.constant 0 : index
      %44 = vector.load %arg6[%c0_36, %c0_37] : memref<1x128xf32, #tpu.memory_space<vmem>>, vector<1x128xf32>
      tpu.vector_store %arg6[%c0_36, %c0_37], %43 {strides = array<i32>} : memref<1x128xf32, #tpu.memory_space<vmem>>, vector<1x128xf32>,
      %c0_38 = arith.constant 0 : index
      %c0_39 = arith.constant 0 : index
      %45 = vector.load %arg7[%c0_38, %c0_39] : memref<1x128xf32, #tpu.memory_space<vmem>>, vector<1x128xf32>
      tpu.vector_store %arg7[%c0_38, %c0_39], %43 {strides = array<i32>} : memref<1x128xf32, #tpu.memory_space<vmem>>, vector<1x128xf32>,
      %c0_40 = arith.constant 0 : index
      %c0_41 = arith.constant 0 : index
      %46 = vector.load %arg8[%c0_40, %c0_41] : memref<1x128xf32, #tpu.memory_space<vmem>>, vector<1x128xf32>
      tpu.vector_store %arg8[%c0_40, %c0_41], %43 {strides = array<i32>} : memref<1x128xf32, #tpu.memory_space<vmem>>, vector<1x128xf32>,
      %c0_42 = arith.constant 0 : index
      %c0_43 = arith.constant 0 : index
      %47 = vector.load %arg9[%c0_42, %c0_43] : memref<1x128xf32, #tpu.memory_space<vmem>>, vector<1x128xf32>
      tpu.vector_store %arg9[%c0_42, %c0_43], %43 {strides = array<i32>} : memref<1x128xf32, #tpu.memory_space<vmem>>, vector<1x128xf32>,
      %c0_44 = arith.constant 0 : index
      %c0_45 = arith.constant 0 : index
      %48 = vector.load %arg10[%c0_44, %c0_45] : memref<1x128xf32, #tpu.memory_space<vmem>>, vector<1x128xf32>
      tpu.vector_store %arg10[%c0_44, %c0_45], %43 {strides = array<i32>} : memref<1x128xf32, #tpu.memory_space<vmem>>, vector<1x128xf32>,
    } else {
    }
    %c0 = arith.constant 0 : index
    %c0_4 = arith.constant 0 : index
    %c0_5 = arith.constant 0 : index
    %8 = vector.load %arg3[%c0, %c0_4, %c0_5] : memref<1x64x128xf32, #tpu.memory_space<vmem>>, vector<1x64x128xf32>
    %9 = vector.shape_cast %8 : vector<1x64x128xf32> to vector<64x128xf32>
    %c0_6 = arith.constant 0 : index
    %c0_7 = arith.constant 0 : index
    %c0_8 = arith.constant 0 : index
    %10 = vector.load %arg4[%c0_6, %c0_7, %c0_8] : memref<1x64x128xf32, #tpu.memory_space<vmem>>, vector<1x64x128xf32>
    %11 = vector.shape_cast %10 : vector<1x64x128xf32> to vector<64x128xf32>
    %c0_9 = arith.constant 0 : index
    %c0_10 = arith.constant 0 : index
    %12 = vector.load %arg6[%c0_9, %c0_10] : memref<1x128xf32, #tpu.memory_space<vmem>>, vector<1x128xf32>
    %cst = arith.constant dense<0.000000e+00> : vector<128xf32>
    %13 = vector.multi_reduction <add>, %9, %cst [0] : vector<64x128xf32> to vector<128xf32>
    %14 = vector.shape_cast %13 : vector<128xf32> to vector<1x128xf32>
    %15 = arith.addf %12, %14 : vector<1x128xf32>
    %c0_11 = arith.constant 0 : index
    %c0_12 = arith.constant 0 : index
    %16 = vector.load %arg6[%c0_11, %c0_12] : memref<1x128xf32, #tpu.memory_space<vmem>>, vector<1x128xf32>
    tpu.vector_store %arg6[%c0_11, %c0_12], %15 {strides = array<i32>} : memref<1x128xf32, #tpu.memory_space<vmem>>, vector<1x128xf32>,
    %c0_13 = arith.constant 0 : index
    %c0_14 = arith.constant 0 : index
    %17 = vector.load %arg7[%c0_13, %c0_14] : memref<1x128xf32, #tpu.memory_space<vmem>>, vector<1x128xf32>
    %cst_15 = arith.constant dense<0.000000e+00> : vector<128xf32>
    %18 = vector.multi_reduction <add>, %11, %cst_15 [0] : vector<64x128xf32> to vector<128xf32>
    %19 = vector.shape_cast %18 : vector<128xf32> to vector<1x128xf32>
    %20 = arith.addf %17, %19 : vector<1x128xf32>
    %c0_16 = arith.constant 0 : index
    %c0_17 = arith.constant 0 : index
    %21 = vector.load %arg7[%c0_16, %c0_17] : memref<1x128xf32, #tpu.memory_space<vmem>>, vector<1x128xf32>
    tpu.vector_store %arg7[%c0_16, %c0_17], %20 {strides = array<i32>} : memref<1x128xf32, #tpu.memory_space<vmem>>, vector<1x128xf32>,
    %c0_18 = arith.constant 0 : index
    %c0_19 = arith.constant 0 : index
    %22 = vector.load %arg8[%c0_18, %c0_19] : memref<1x128xf32, #tpu.memory_space<vmem>>, vector<1x128xf32>
    %23 = arith.mulf %9, %11 : vector<64x128xf32>
    %cst_20 = arith.constant dense<0.000000e+00> : vector<128xf32>
    %24 = vector.multi_reduction <add>, %23, %cst_20 [0] : vector<64x128xf32> to vector<128xf32>
    %25 = vector.shape_cast %24 : vector<128xf32> to vector<1x128xf32>
    %26 = arith.addf %22, %25 : vector<1x128xf32>
    %c0_21 = arith.constant 0 : index
    %c0_22 = arith.constant 0 : index
    %27 = vector.load %arg8[%c0_21, %c0_22] : memref<1x128xf32, #tpu.memory_space<vmem>>, vector<1x128xf32>
    tpu.vector_store %arg8[%c0_21, %c0_22], %26 {strides = array<i32>} : memref<1x128xf32, #tpu.memory_space<vmem>>, vector<1x128xf32>,
    %c0_23 = arith.constant 0 : index
    %c0_24 = arith.constant 0 : index
    %28 = vector.load %arg9[%c0_23, %c0_24] : memref<1x128xf32, #tpu.memory_space<vmem>>, vector<1x128xf32>
    %29 = arith.mulf %9, %9 : vector<64x128xf32>
    %cst_25 = arith.constant dense<0.000000e+00> : vector<128xf32>
    %30 = vector.multi_reduction <add>, %29, %cst_25 [0] : vector<64x128xf32> to vector<128xf32>
    %31 = vector.shape_cast %30 : vector<128xf32> to vector<1x128xf32>
    %32 = arith.addf %28, %31 : vector<1x128xf32>
    %c0_26 = arith.constant 0 : index
    %c0_27 = arith.constant 0 : index
    %33 = vector.load %arg9[%c0_26, %c0_27] : memref<1x128xf32, #tpu.memory_space<vmem>>, vector<1x128xf32>
    tpu.vector_store %arg9[%c0_26, %c0_27], %32 {strides = array<i32>} : memref<1x128xf32, #tpu.memory_space<vmem>>, vector<1x128xf32>,
    %c0_28 = arith.constant 0 : index
    %c0_29 = arith.constant 0 : index
    %34 = vector.load %arg10[%c0_28, %c0_29] : memref<1x128xf32, #tpu.memory_space<vmem>>, vector<1x128xf32>
    %35 = arith.mulf %11, %11 : vector<64x128xf32>
    %cst_30 = arith.constant dense<0.000000e+00> : vector<128xf32>
    %36 = vector.multi_reduction <add>, %35, %cst_30 [0] : vector<64x128xf32> to vector<128xf32>
    %37 = vector.shape_cast %36 : vector<128xf32> to vector<1x128xf32>
    %38 = arith.addf %34, %37 : vector<1x128xf32>
    %c0_31 = arith.constant 0 : index
    %c0_32 = arith.constant 0 : index
    %39 = vector.load %arg10[%c0_31, %c0_32] : memref<1x128xf32, #tpu.memory_space<vmem>>, vector<1x128xf32>
    tpu.vector_store %arg10[%c0_31, %c0_32], %38 {strides = array<i32>} : memref<1x128xf32, #tpu.memory_space<vmem>>, vector<1x128xf32>,
    %c0_i32_33 = arith.constant 0 : i32
    %40 = arith.cmpi eq, %arg2, %c0_i32_33 : i32
    %41 = arith.extui %40 : i1 to i32
    %c0_i32_34 = arith.constant 0 : i32
    %42 = arith.cmpi ne, %41, %c0_i32_34 : i32
    scf.if %42 {
      %c0_35 = arith.constant 0 : index
      %c0_36 = arith.constant 0 : index
      %43 = vector.load %arg6[%c0_35, %c0_36] : memref<1x128xf32, #tpu.memory_space<vmem>>, vector<1x128xf32>
      %c0_37 = arith.constant 0 : index
      %c0_38 = arith.constant 0 : index
      %44 = vector.load %arg7[%c0_37, %c0_38] : memref<1x128xf32, #tpu.memory_space<vmem>>, vector<1x128xf32>
      %c0_39 = arith.constant 0 : index
      %c0_40 = arith.constant 0 : index
      %45 = vector.load %arg8[%c0_39, %c0_40] : memref<1x128xf32, #tpu.memory_space<vmem>>, vector<1x128xf32>
      %46 = arith.mulf %43, %44 : vector<1x128xf32>
      %cst_41 = arith.constant 1.562500e-02 : f32
      %47 = vector.broadcast %cst_41 : f32 to vector<1x128xf32>
      %48 = arith.mulf %46, %47 : vector<1x128xf32>
      %49 = arith.subf %45, %48 : vector<1x128xf32>
      %c0_42 = arith.constant 0 : index
      %c0_43 = arith.constant 0 : index
      %50 = vector.load %arg9[%c0_42, %c0_43] : memref<1x128xf32, #tpu.memory_space<vmem>>, vector<1x128xf32>
      %51 = arith.mulf %43, %43 : vector<1x128xf32>
      %cst_44 = arith.constant 1.562500e-02 : f32
      %52 = vector.broadcast %cst_44 : f32 to vector<1x128xf32>
      %53 = arith.mulf %51, %52 : vector<1x128xf32>
      %54 = arith.subf %50, %53 : vector<1x128xf32>
      %cst_45 = arith.constant 0.000000e+00 : f32
      %55 = vector.broadcast %cst_45 : f32 to vector<1x128xf32>
      %56 = arith.maximumf %54, %55 : vector<1x128xf32>
      %c0_46 = arith.constant 0 : index
      %c0_47 = arith.constant 0 : index
      %57 = vector.load %arg10[%c0_46, %c0_47] : memref<1x128xf32, #tpu.memory_space<vmem>>, vector<1x128xf32>
      %58 = arith.mulf %44, %44 : vector<1x128xf32>
      %cst_48 = arith.constant 1.562500e-02 : f32
      %59 = vector.broadcast %cst_48 : f32 to vector<1x128xf32>
      %60 = arith.mulf %58, %59 : vector<1x128xf32>
      %61 = arith.subf %57, %60 : vector<1x128xf32>
      %cst_49 = arith.constant 0.000000e+00 : f32
      %62 = vector.broadcast %cst_49 : f32 to vector<1x128xf32>
      %63 = arith.maximumf %61, %62 : vector<1x128xf32>
      %64 = arith.mulf %56, %63 : vector<1x128xf32>
      %cst_50 = arith.constant 0.000000e+00 : f32
      %65 = vector.broadcast %cst_50 : f32 to vector<1x128xf32>
      %66 = arith.cmpf oeq, %64, %65 : vector<1x128xf32>
      %67 = math.rsqrt %64 : vector<1x128xf32>
      %cst_51 = arith.constant 1.000000e+07 : f32
      %68 = vector.broadcast %cst_51 : f32 to vector<1x128xf32>
      %69 = arith.select %66, %68, %67 : vector<1x128xi1>, vector<1x128xf32>
      %c0_52 = arith.constant 0 : index
      %c0_53 = arith.constant 0 : index
      %70 = vector.load %arg5[%c0_52, %c0_53] : memref<1x128xf32, #tpu.memory_space<vmem>>, vector<1x128xf32>
      %71 = arith.mulf %49, %69 : vector<1x128xf32>
      %72 = arith.addf %70, %71 : vector<1x128xf32>
      %c0_54 = arith.constant 0 : index
      %c0_55 = arith.constant 0 : index
      %73 = vector.load %arg5[%c0_54, %c0_55] : memref<1x128xf32, #tpu.memory_space<vmem>>, vector<1x128xf32>
      tpu.vector_store %arg5[%c0_54, %c0_55], %72 {strides = array<i32>} : memref<1x128xf32, #tpu.memory_space<vmem>>, vector<1x128xf32>,
      %c1_i32 = arith.constant 1 : i32
      %74 = arith.cmpi eq, %arg1, %c1_i32 : i32
      %75 = arith.extui %74 : i1 to i32
      %c0_i32_56 = arith.constant 0 : i32
      %76 = arith.cmpi ne, %75, %c0_i32_56 : i32
      scf.if %76 {
        %c0_57 = arith.constant 0 : index
        %c0_58 = arith.constant 0 : index
        %77 = vector.load %arg5[%c0_57, %c0_58] : memref<1x128xf32, #tpu.memory_space<vmem>>, vector<1x128xf32>
        %cst_59 = arith.constant 5.000000e-01 : f32
        %78 = vector.broadcast %cst_59 : f32 to vector<1x128xf32>
        %79 = arith.mulf %77, %78 : vector<1x128xf32>
        %c0_60 = arith.constant 0 : index
        %c0_61 = arith.constant 0 : index
        %80 = vector.load %arg5[%c0_60, %c0_61] : memref<1x128xf32, #tpu.memory_space<vmem>>, vector<1x128xf32>
        tpu.vector_store %arg5[%c0_60, %c0_61], %79 {strides = array<i32>} : memref<1x128xf32, #tpu.memory_space<vmem>>, vector<1x128xf32>,
      } else {
      }
    } else {
    }
    return
  }
  func.func @transform_0(%arg0: i32, %arg1: i32, %arg2: i32) -> (i32, i32, i32) {
    %c0_i32 = arith.constant 0 : i32
    return %arg1, %arg2, %arg0 : i32, i32, i32
  }
  func.func @transform_1(%arg0: i32, %arg1: i32, %arg2: i32) -> (i32, i32, i32) {
    %c0_i32 = arith.constant 0 : i32
    return %arg1, %arg2, %arg0 : i32, i32, i32
  }
  func.func @transform_2(%arg0: i32, %arg1: i32, %arg2: i32) -> (i32, i32) {
    %c0_i32 = arith.constant 0 : i32
    %c0_i32_0 = arith.constant 0 : i32
    return %c0_i32, %arg0 : i32, i32
  }
}

</mosaic_0001>

<llo_original>
// kernel: correlation_loss.1
$region0: #{correlation_loss.1}
  #allocation0 [shape = 'u32[]', space=smem, size = 0x4, offset = 0x4, fixed_abs, tag = 'smem constant byte address 0x4 - core index']
  #allocation1 [shape = 'u32[72,128]{1,0:T(1,128)}', space=vmem, size = 0x9000, scoped, tag = 'internal scratch']
  #allocation2 [shape = 'f32[1,128]{1,0:T(1,128)}', space=vmem, size = 0x200, scoped, tag = 'scratch operand']
  #allocation3 [shape = 'f32[1,128]{1,0:T(1,128)}', space=vmem, size = 0x200, scoped, tag = 'scratch operand']
  #allocation4 [shape = 'f32[1,128]{1,0:T(1,128)}', space=vmem, size = 0x200, scoped, tag = 'scratch operand']
  #allocation5 [shape = 'f32[1,128]{1,0:T(1,128)}', space=vmem, size = 0x200, scoped, tag = 'scratch operand']
  #allocation6 [shape = 'f32[1,128]{1,0:T(1,128)}', space=vmem, size = 0x200, scoped, tag = 'scratch operand']
  %s0 = inlined_call_operand.vmem [shape: f32[2,64,128], index: 0, kind: input, shape index: {}]
  %s1 = inlined_call_operand.vmem [shape: f32[2,64,128], index: 1, kind: input, shape index: {}]
  %s2 = inlined_call_operand.vmem [shape: f32[1,128], index: 2, kind: output, shape index: {}]
  %s3 = sld [smem:[#allocation0]]
  $region57: #{correlation_loss.1} parent=0
    _
  %s5 = ssub.s32 1, %s3
  %s6 = scalar_select 0, %s5, %s3
  loop: start=0, step=1, limit=4
  $region2: #{correlation_loss.1} parent=0 // loop_pre_header
    _
  $region3: #{correlation_loss.1} parent=0 // loop_header
    %s8 = sphi 0, %s12
    %p9 = scmp.ge.s32.totalorder %s8, 4
    %s15 = sphi 0, %s34
    %s16 = sphi 0, %s30
    %s17 = sphi 0, %s26
    %s18 = sphi 0, %s15
    %s19 = sphi 0, %s16
    %s20 = sphi 0, %s17
    %s21 = sphi 0, %s18
    %s22 = sphi 0, %s19
    %s23 = sphi 0, %s20
    %s41 = sphi 0, %s43
    %s44 = sphi 0, %s41
    %s45 = sphi 0, %s44
    %s61 = sphi 0, %s45
    %s71 = sphi 0, %s73
    %s74 = sphi 0, %s71
    %s75 = sphi 0, %s74
    %s91 = sphi 0, %s75
    %s97 = sphi 0, %s99
    %s100 = sphi 0, %s97
    %s101 = sphi 0, %s100
    %s117 = sphi 0, %s101
  $region4: #{correlation_loss.1} parent=0 // loop_header_branch
    %11 = sbr.rel (%p9) target = $region8
  $region5: #{correlation_loss.1} parent=0 // loop_body
    %s13 = ssub.s32 %s8, 1
    %s14 = ssub.s32 %s8, 2
    %s24 = sadd.s32 1, %s17
    %p25 = scmp.ge.s32.totalorder %s24, 1
    %s26 = scalar_select %p25, 0, %s24
    %s27 = sadd.s32 1, %s16
    %s28 = scalar_select %p25, %s27, %s16
    %p29 = scmp.ge.s32.totalorder %s28, 2
    %s30 = scalar_select %p29, 0, %s28
    %s31 = sadd.s32 1, %s15
    %s32 = scalar_select %p29, %s31, %s15
    %p33 = scmp.ge.s32.totalorder %s32, 1
    %s34 = scalar_select %p33, 0, %s32
    %s35 = ssub.s32 %s16, %s30
    %s36 = ssub.s32 %s17, %s26
    %s37 = sor.u32 %s35, %s36
    %s38 = ssub.s32 %s15, %s34
    %s39 = sor.u32 %s37, %s38
    %p40 = scmp.eq.s32.totalorder %s39, 0
    %s42 = sadd.s32 %s41, 1
    %s43 = scalar_select %p40, %s41, %s42
    %p46 = pneg %p40
    %p47 = scmp.eq.s32.totalorder %s8, 1
    %p48 = por %p46, %p47
    %p49 = scmp.ne.s32.totalorder %s41, %s44
    %p50 = scmp.eq.s32.totalorder %s8, 0
    %p51 = por %p49, %p50
    %p52 = scmp.ne.s32.totalorder %s41, %s44
    %p53 = scmp.eq.s32.totalorder %s13, 1
    %p54 = por %p52, %p53
    %p55 = scmp.ne.s32.totalorder %s44, %s45
    %p56 = scmp.eq.s32.totalorder %s13, 0
    %p57 = por %p55, %p56
    %p58 = scmp.ne.s32.totalorder %s44, %s45
    %p59 = scmp.eq.s32.totalorder %s14, 1
    %p60 = por %p58, %p59
    %p62 = scmp.ne.s32.totalorder %s45, %s61
    %p63 = scmp.eq.s32.totalorder %s14, 0
    %p64 = por %p62, %p63
    %s65 = ssub.s32 %s16, %s30
    %s66 = ssub.s32 %s17, %s26
    %s67 = sor.u32 %s65, %s66
    %s68 = ssub.s32 %s15, %s34
    %s69 = sor.u32 %s67, %s68
    %p70 = scmp.eq.s32.totalorder %s69, 0
    %s72 = sadd.s32 %s71, 1
    %s73 = scalar_select %p70, %s71, %s72
    %p76 = pneg %p70
    %p77 = scmp.eq.s32.totalorder %s8, 1
    %p78 = por %p76, %p77
    %p79 = scmp.ne.s32.totalorder %s71, %s74
    %p80 = scmp.eq.s32.totalorder %s8, 0
    %p81 = por %p79, %p80
    %p82 = scmp.ne.s32.totalorder %s71, %s74
    %p83 = scmp.eq.s32.totalorder %s13, 1
    %p84 = por %p82, %p83
    %p85 = scmp.ne.s32.totalorder %s74, %s75
    %p86 = scmp.eq.s32.totalorder %s13, 0
    %p87 = por %p85, %p86
    %p88 = scmp.ne.s32.totalorder %s74, %s75
    %p89 = scmp.eq.s32.totalorder %s14, 1
    %p90 = por %p88, %p89
    %p92 = scmp.ne.s32.totalorder %s75, %s91
    %p93 = scmp.eq.s32.totalorder %s14, 0
    %p94 = por %p92, %p93
    %s95 = ssub.s32 %s15, %s34
    %p96 = scmp.eq.s32.totalorder %s95, 0
    %s98 = sadd.s32 %s97, 1
    %s99 = scalar_select %p96, %s97, %s98
    %p102 = pneg %p96
    %p103 = scmp.eq.s32.totalorder %s8, 1
    %p104 = por %p102, %p103
    %p105 = scmp.ne.s32.totalorder %s97, %s100
    %p106 = scmp.eq.s32.totalorder %s8, 0
    %p107 = por %p105, %p106
    %p108 = scmp.ne.s32.totalorder %s97, %s100
    %p109 = scmp.eq.s32.totalorder %s13, 1
    %p110 = por %p108, %p109
    %p111 = scmp.ne.s32.totalorder %s100, %s101
    %p112 = scmp.eq.s32.totalorder %s13, 0
    %p113 = por %p111, %p112
    %p114 = scmp.ne.s32.totalorder %s100, %s101
    %p115 = scmp.eq.s32.totalorder %s14, 1
    %p116 = por %p114, %p115
    %p118 = scmp.ne.s32.totalorder %s101, %s117
    %p119 = scmp.eq.s32.totalorder %s14, 0
    %p120 = por %p118, %p119
    %p121 = scmp.le.s32.totalorder 1, %s8
    %p122 = scmp.lt.s32.totalorder %s8, 3
    %p123 = pnand %p121, %p122
    %p124 = pneg %p123
    // Predicated region
    $region9: #{correlation_loss.1} parent=5 // pred_check
      _
    $region10: #{correlation_loss.1} parent=5 // pred_check_branch
      %126 = sbr.rel (%p123) target = $region12
    $region11: #{correlation_loss.1} parent=5 // pred_region
      %s127 = ssub.s32 %s8, 1
    $region12: #{correlation_loss.1} parent=5 // pred_fallthru
      _
    %p128 = scmp.lt.s32.totalorder %s8, 2
    // Predicated region
    $region13: #{correlation_loss.1} parent=5 // pred_check
      %p129 = pneg %p128
    $region14: #{correlation_loss.1} parent=5 // pred_check_branch
      %131 = sbr.rel (%p129) target = $region16
    $region15: #{correlation_loss.1} parent=5 // pred_region
      // Predicated region
      $region17: #{correlation_loss.1} parent=15 // pred_check
        %p132 = pneg %p51
      $region18: #{correlation_loss.1} parent=15 // pred_check_branch
        %134 = sbr.rel (%p132) target = $region20
      $region19: #{correlation_loss.1} parent=15 // pred_region
        %s135 = smul.u32 8, %s17
        %p136 = scmp.lt.s32.totalorder %s16, 1
        %s137 = scalar_select %p136, %s16, 1
        %p138 = scmp.lt.s32.totalorder %s135, 7
        %s139 = scalar_select %p138, %s135, 7
        %p140 = scmp.lt.s32.totalorder %s15, 0
        %s141 = scalar_select %p140, %s15, 0
        %s142 = sadd.s32 %s141, %s139
        %s143 = smul.addr %s137, 8
        %s144 = sadd.s32 %s142, %s143
        %s145 = smul.addr %s144, 8
        %s146 = scalar_lea.vmem %s0, %s145
        %s147 = smul.u32 8, %s17
      $region20: #{correlation_loss.1} parent=15 // pred_fallthru
        _
      // Predicated region
      $region21: #{correlation_loss.1} parent=15 // pred_check
        %p148 = pneg %p81
      $region22: #{correlation_loss.1} parent=15 // pred_check_branch
        %150 = sbr.rel (%p148) target = $region24
      $region23: #{correlation_loss.1} parent=15 // pred_region
        %s151 = smul.u32 8, %s17
        %p152 = scmp.lt.s32.totalorder %s16, 1
        %s153 = scalar_select %p152, %s16, 1
        %p154 = scmp.lt.s32.totalorder %s151, 7
        %s155 = scalar_select %p154, %s151, 7
        %p156 = scmp.lt.s32.totalorder %s15, 0
        %s157 = scalar_select %p156, %s15, 0
        %s158 = sadd.s32 %s157, %s155
        %s159 = smul.addr %s153, 8
        %s160 = sadd.s32 %s158, %s159
        %s161 = smul.addr %s160, 8
        %s162 = scalar_lea.vmem %s1, %s161
        %s163 = smul.u32 8, %s17
      $region24: #{correlation_loss.1} parent=15 // pred_fallthru
        _
    $region16: #{correlation_loss.1} parent=5 // pred_fallthru
      _
    %p164 = scmp.le.s32.totalorder 1, %s8
    %p165 = scmp.lt.s32.totalorder %s8, 3
    %p166 = pnand %p164, %p165
    %p167 = pneg %p166
    // Predicated region
    $region25: #{correlation_loss.1} parent=5 // pred_check
      _
    $region26: #{correlation_loss.1} parent=5 // pred_check_branch
      %169 = sbr.rel (%p166) target = $region28
    $region27: #{correlation_loss.1} parent=5 // pred_region
      %s170 = ssub.s32 %s8, 1
      %s171 = smul.u32 8, %s20
      %p172 = scmp.lt.s32.totalorder %s19, 1
      %s173 = scalar_select %p172, %s19, 1
      %p174 = scmp.lt.s32.totalorder %s171, 7
      %s175 = scalar_select %p174, %s171, 7
      %p176 = scmp.lt.s32.totalorder %s18, 0
      %s177 = scalar_select %p176, %s18, 0
      %s178 = sadd.s32 %s177, %s175
      %s179 = smul.addr %s173, 8
      %s180 = sadd.s32 %s178, %s179
      %s181 = smul.addr %s180, 8
      %s182 = scalar_lea.vmem %s0, %s181
      %p183 = pneg %p57
      %p184 = pneg %p54
      %s185 = smul.u32 8, %s20
      %p186 = scmp.lt.s32.totalorder %s19, 1
      %s187 = scalar_select %p186, %s19, 1
      %p188 = scmp.lt.s32.totalorder %s185, 7
      %s189 = scalar_select %p188, %s185, 7
      %p190 = scmp.lt.s32.totalorder %s18, 0
      %s191 = scalar_select %p190, %s18, 0
      %s192 = sadd.s32 %s191, %s189
      %s193 = smul.addr %s187, 8
      %s194 = sadd.s32 %s192, %s193
      %s195 = smul.addr %s194, 8
      %s196 = scalar_lea.vmem %s1, %s195
      %p197 = pneg %p87
      %p198 = pneg %p84
      %p199 = pneg %p113
      %p200 = pneg %p110
      %p201 = scmp.lt.s32.totalorder %s18, 0
      %s202 = scalar_select %p201, %s18, 0
      %s203 = scalar_lea.vmem %s2, %s202
      %s204 = smul.u32 8, %s20
      %p205 = scmp.lt.s32.totalorder %s19, 1
      %s206 = scalar_select %p205, %s19, 1
      %p207 = scmp.lt.s32.totalorder %s204, 7
      %s208 = scalar_select %p207, %s204, 7
      %p209 = scmp.lt.s32.totalorder %s18, 0
      %s210 = scalar_select %p209, %s18, 0
      %s211 = sadd.s32 %s210, %s208
      %s212 = smul.addr %s206, 8
      %s213 = sadd.s32 %s211, %s212
      %s214 = smul.addr %s213, 8
      %s215 = scalar_lea.vmem %s0, %s214
      %s216 = smul.u32 8, %s20
      %s217 = smul.u32 8, %s20
      %p218 = scmp.lt.s32.totalorder %s19, 1
      %s219 = scalar_select %p218, %s19, 1
      %p220 = scmp.lt.s32.totalorder %s217, 7
      %s221 = scalar_select %p220, %s217, 7
      %p222 = scmp.lt.s32.totalorder %s18, 0
      %s223 = scalar_select %p222, %s18, 0
      %s224 = sadd.s32 %s223, %s221
      %s225 = smul.addr %s219, 8
      %s226 = sadd.s32 %s224, %s225
      %s227 = smul.addr %s226, 8
      %s228 = scalar_lea.vmem %s1, %s227
      %s229 = smul.u32 8, %s20
      %p230 = scmp.lt.s32.totalorder %s18, 0
      %s231 = scalar_select %p230, %s18, 0
      %s232 = scalar_lea.vmem %s2, %s231
      %p233 = scmp.eq.s32.totalorder %s19, 0
      %p234 = scmp.eq.s32.totalorder %s20, 0
      %p235 = pnand %p233, %p234
      %p236 = pneg %p235
      // Predicated region
      $region29: #{correlation_loss.1} parent=27 // pred_check
        _
      $region30: #{correlation_loss.1} parent=27 // pred_check_branch
        %238 = sbr.rel (%p235) target = $region32
      $region31: #{correlation_loss.1} parent=27 // pred_region
        %239 = vst [vmem:[%s232] sm:$0x1] 0.0
      $region32: #{correlation_loss.1} parent=27 // pred_fallthru
        _
      // Predicated region
      $region33: #{correlation_loss.1} parent=27 // pred_check
        %p240 = pneg %p234
      $region34: #{correlation_loss.1} parent=27 // pred_check_branch
        %242 = sbr.rel (%p240) target = $region36
      $region35: #{correlation_loss.1} parent=27 // pred_region
        %243 = vst [vmem:[#allocation2] sm:$0x1] 0.0
        %244 = vst [vmem:[#allocation3] sm:$0x1] 0.0
        %245 = vst [vmem:[#allocation4] sm:$0x1] 0.0
        %246 = vst [vmem:[#allocation5] sm:$0x1] 0.0
        %247 = vst [vmem:[#allocation6] sm:$0x1] 0.0
      $region36: #{correlation_loss.1} parent=27 // pred_fallthru
        _
      %v248 = vld [vmem:[%s215] sm:$0xff]
      %v249 = vld [vmem:[%s215 + $0x8] sm:$0xff]
      %v250 = vld [vmem:[%s215 + $0x10] sm:$0xff]
      %v251 = vld [vmem:[%s215 + $0x18] sm:$0xff]
      %v252 = vld [vmem:[%s215 + $0x20] sm:$0xff]
      %v253 = vld [vmem:[%s215 + $0x28] sm:$0xff]
      %v254 = vld [vmem:[%s215 + $0x30] sm:$0xff]
      %v255 = vld [vmem:[%s215 + $0x38] sm:$0xff]
      %v256 = vld [vmem:[%s228] sm:$0xff]
      %v257 = vld [vmem:[%s228 + $0x8] sm:$0xff]
      %v258 = vld [vmem:[%s228 + $0x10] sm:$0xff]
      %v259 = vld [vmem:[%s228 + $0x18] sm:$0xff]
      %v260 = vld [vmem:[%s228 + $0x20] sm:$0xff]
      %v261 = vld [vmem:[%s228 + $0x28] sm:$0xff]
      %v262 = vld [vmem:[%s228 + $0x30] sm:$0xff]
      %v263 = vld [vmem:[%s228 + $0x38] sm:$0xff]
      %v264 = vld [vmem:[#allocation2] sm:$0x1]
      %v265 = vadd.f32 %v248, %v249
      %v266 = vadd.f32 %v265, %v250
      %v267 = vadd.f32 %v266, %v251
      %v268 = vadd.f32 %v267, %v252
      %v269 = vadd.f32 %v268, %v253
      %v270 = vadd.f32 %v269, %v254
      %v271 = vadd.f32 %v270, %v255
      %v272 = vrot.slane %v271, 4
      %v273 = vadd.f32 %v271, %v272
      %v274 = vrot.slane %v273, 2
      %v275 = vadd.f32 %v273, %v274
      %v276 = vrot.slane %v275, 1
      %v277 = vadd.f32 %v275, %v276
      %v278 = vadd.f32 %v264, %v277
      %279 = vst [vmem:[#allocation2] sm:$0x1] %v278
      %v280 = vld [vmem:[#allocation3] sm:$0x1]
      %v281 = vadd.f32 %v256, %v257
      %v282 = vadd.f32 %v281, %v258
      %v283 = vadd.f32 %v282, %v259
      %v284 = vadd.f32 %v283, %v260
      %v285 = vadd.f32 %v284, %v261
      %v286 = vadd.f32 %v285, %v262
      %v287 = vadd.f32 %v286, %v263
      %v288 = vrot.slane %v287, 4
      %v289 = vadd.f32 %v287, %v288
      %v290 = vrot.slane %v289, 2
      %v291 = vadd.f32 %v289, %v290
      %v292 = vrot.slane %v291, 1
      %v293 = vadd.f32 %v291, %v292
      %v294 = vadd.f32 %v280, %v293
      %295 = vst [vmem:[#allocation3] sm:$0x1] %v294
      %v296 = vld [vmem:[#allocation4] sm:$0x1]
      %v297 = vmul.f32 %v248, %v256
      %v298 = vmul.f32 %v249, %v257
      %v299 = vmul.f32 %v250, %v258
      %v300 = vmul.f32 %v251, %v259
      %v301 = vmul.f32 %v252, %v260
      %v302 = vmul.f32 %v253, %v261
      %v303 = vmul.f32 %v254, %v262
      %v304 = vmul.f32 %v255, %v263
      %v305 = vadd.f32 %v297, %v298
      %v306 = vadd.f32 %v305, %v299
      %v307 = vadd.f32 %v306, %v300
      %v308 = vadd.f32 %v307, %v301
      %v309 = vadd.f32 %v308, %v302
      %v310 = vadd.f32 %v309, %v303
      %v311 = vadd.f32 %v310, %v304
      %v312 = vrot.slane %v311, 4
      %v313 = vadd.f32 %v311, %v312
      %v314 = vrot.slane %v313, 2
      %v315 = vadd.f32 %v313, %v314
      %v316 = vrot.slane %v315, 1
      %v317 = vadd.f32 %v315, %v316
      %v318 = vadd.f32 %v296, %v317
      %319 = vst [vmem:[#allocation4] sm:$0x1] %v318
      %v320 = vld [vmem:[#allocation5] sm:$0x1]
      %v321 = vmul.f32 %v248, %v248
      %v322 = vmul.f32 %v249, %v249
      %v323 = vmul.f32 %v250, %v250
      %v324 = vmul.f32 %v251, %v251
      %v325 = vmul.f32 %v252, %v252
      %v326 = vmul.f32 %v253, %v253
      %v327 = vmul.f32 %v254, %v254
      %v328 = vmul.f32 %v255, %v255
      %v329 = vadd.f32 %v321, %v322
      %v330 = vadd.f32 %v329, %v323
      %v331 = vadd.f32 %v330, %v324
      %v332 = vadd.f32 %v331, %v325
      %v333 = vadd.f32 %v332, %v326
      %v334 = vadd.f32 %v333, %v327
      %v335 = vadd.f32 %v334, %v328
      %v336 = vrot.slane %v335, 4
      %v337 = vadd.f32 %v335, %v336
      %v338 = vrot.slane %v337, 2
      %v339 = vadd.f32 %v337, %v338
      %v340 = vrot.slane %v339, 1
      %v341 = vadd.f32 %v339, %v340
      %v342 = vadd.f32 %v320, %v341
      %343 = vst [vmem:[#allocation5] sm:$0x1] %v342
      %v344 = vld [vmem:[#allocation6] sm:$0x1]
      %v345 = vmul.f32 %v256, %v256
      %v346 = vmul.f32 %v257, %v257
      %v347 = vmul.f32 %v258, %v258
      %v348 = vmul.f32 %v259, %v259
      %v349 = vmul.f32 %v260, %v260
      %v350 = vmul.f32 %v261, %v261
      %v351 = vmul.f32 %v262, %v262
      %v352 = vmul.f32 %v263, %v263
      %v353 = vadd.f32 %v345, %v346
      %v354 = vadd.f32 %v353, %v347
      %v355 = vadd.f32 %v354, %v348
      %v356 = vadd.f32 %v355, %v349
      %v357 = vadd.f32 %v356, %v350
      %v358 = vadd.f32 %v357, %v351
      %v359 = vadd.f32 %v358, %v352
      %v360 = vrot.slane %v359, 4
      %v361 = vadd.f32 %v359, %v360
      %v362 = vrot.slane %v361, 2
      %v363 = vadd.f32 %v361, %v362
      %v364 = vrot.slane %v363, 1
      %v365 = vadd.f32 %v363, %v364
      %v366 = vadd.f32 %v344, %v365
      %367 = vst [vmem:[#allocation6] sm:$0x1] %v366
      // Predicated region
      $region37: #{correlation_loss.1} parent=27 // pred_check
        %p368 = pneg %p234
      $region38: #{correlation_loss.1} parent=27 // pred_check_branch
        %370 = sbr.rel (%p368) target = $region40
      $region39: #{correlation_loss.1} parent=27 // pred_region
        %v371 = vld [vmem:[#allocation2] sm:$0x1]
        %v372 = vld [vmem:[#allocation3] sm:$0x1]
        %v373 = vld [vmem:[#allocation4] sm:$0x1]
        %v374 = vmul.f32 %v371, %v372
        %v375 = vmul.f32 %v374, 0.015625
        %v376 = vsub.f32 %v373, %v375
        %v377 = vld [vmem:[#allocation5] sm:$0x1]
        %v378 = vmul.f32 %v371, %v371
        %v379 = vmul.f32 %v378, 0.015625
        %v380 = vsub.f32 %v377, %v379
        %v381 = vmax.f32 %v380, 0.0
        %v382 = vld [vmem:[#allocation6] sm:$0x1]
        %v383 = vmul.f32 %v372, %v372
        %v384 = vmul.f32 %v383, 0.015625
        %v385 = vsub.f32 %v382, %v384
        %v386 = vmax.f32 %v385, 0.0
        %v387 = vmul.f32 %v381, %v386
        %vm388 = vcmp.eq.f32.partialorder %v387, 0.0
        %v389 = vrsqrt.pop %v387
        %v390 = vmul.f32 %v389, %v387
        %v391 = vmul.f32 %v390, %v389
        %v392 = vmul.f32 0.5, %v391
        %v393 = vsub.f32 1.5, %v392
        %v394 = vmul.f32 %v389, %v393
        %vm395 = vweird.f32 %v387
        %vm396 = vweird.f32 %v389
        %vm397 = vmor %vm395, %vm396
        %v398 = vsel %vm397, %v389, %v394
        %v399 = vsel %vm388, 10000000.0, %v398
        %v400 = vld [vmem:[%s232] sm:$0x1]
        %v401 = vmul.f32 %v376, %v399
        %v402 = vadd.f32 %v400, %v401
        %403 = vst [vmem:[%s232] sm:$0x1] %v402
        %p404 = scmp.eq.s32.totalorder %s19, 1
        // Predicated region
        $region41: #{correlation_loss.1} parent=39 // pred_check
          %p405 = pneg %p404
        $region42: #{correlation_loss.1} parent=39 // pred_check_branch
          %407 = sbr.rel (%p405) target = $region44
        $region43: #{correlation_loss.1} parent=39 // pred_region
          %v408 = vld [vmem:[%s232] sm:$0x1]
          %v409 = vmul.f32 %v408, 0.5
          %410 = vst [vmem:[%s232] sm:$0x1] %v409
        $region44: #{correlation_loss.1} parent=39 // pred_fallthru
          _
      $region40: #{correlation_loss.1} parent=27 // pred_fallthru
        _
      %p411 = scmp.lt.s32.totalorder %s18, 0
      %s412 = scalar_select %p411, %s18, 0
      %s413 = scalar_lea.vmem %s2, %s412
      // Predicated region
      $region45: #{correlation_loss.1} parent=27 // pred_check
        %p414 = pneg %p110
      $region46: #{correlation_loss.1} parent=27 // pred_check_branch
        %416 = sbr.rel (%p414) target = $region48
      $region47: #{correlation_loss.1} parent=27 // pred_region
        _
      $region48: #{correlation_loss.1} parent=27 // pred_fallthru
        _
      // Predicated region
      $region49: #{correlation_loss.1} parent=27 // pred_check
        %p417 = pneg %p110
      $region50: #{correlation_loss.1} parent=27 // pred_check_branch
        %419 = sbr.rel (%p417) target = $region52
      $region51: #{correlation_loss.1} parent=27 // pred_region
        %p420 = scmp.lt.s32.totalorder %s18, 0
        %s421 = scalar_select %p420, %s18, 0
        %s422 = scalar_lea.vmem %s2, %s421
      $region52: #{correlation_loss.1} parent=27 // pred_fallthru
        _
    $region28: #{correlation_loss.1} parent=5 // pred_fallthru
      _
    %p423 = scmp.le.s32.totalorder 2, %s8
    // Predicated region
    $region53: #{correlation_loss.1} parent=5 // pred_check
      %p424 = pneg %p423
    $region54: #{correlation_loss.1} parent=5 // pred_check_branch
      %426 = sbr.rel (%p424) target = $region56
    $region55: #{correlation_loss.1} parent=5 // pred_region
      %s427 = ssub.s32 %s8, 2
    $region56: #{correlation_loss.1} parent=5 // pred_fallthru
      _
  $region6: #{correlation_loss.1} parent=0 // loop_footer
    %s12 = sadd.s32 1, %s8
  $region7: #{correlation_loss.1} parent=0 // loop_footer_branch
    %7 = sbr.rel target = $region3
  $region8: #{correlation_loss.1} parent=0 // loop_exit
    _

</llo_original>
